<compile_context>
chip_gen: v5e
topology: v5e:2x2
jax: 0.10.0
libtpu: 0.0.40
codegen_flags: <defaults>
</compile_context>

<pallas_src>
import functools

import jax
import jax.numpy as jnp
from jax import lax
from jax.experimental import pallas as pl
from jax.experimental.pallas import tpu as pltpu


def _bilstm_recurrence_kernel(gin_ref, whh_ref, wlin_ref, blin_ref, out_ref, h_ref, c_ref):
    """One time-chunk of the fused bidirectional LSTM recurrence (+ head on the last chunk).

    gin_ref : (Tt, 2B, 4H) f32 precomputed gate inputs. Rows [0:B] = forward direction at
              global step t, rows [B:2B] = backward direction at global step T-1-t (the
              backward time-reversal is baked into the gather indices upstream).
              Gate order along the last axis: i, f, g, o.
    whh_ref : (2H, 4H) f32 = vstack([Whh_fwd, Whh_bwd]).  h is carried zero-padded
              ([h_f | 0] for forward rows, [0 | h_b] for backward rows) so a single
              (2B,2H) x (2H,4H) MXU push computes both directions' recurrent gates.
    wlin_ref: (1, 2H) linear-head weight (row vector);  blin_ref: (1, 1) bias.
    out_ref : (B, 1) sigmoid(logit); written on the last grid step only.
    h_ref   : (2B, 2H) f32 VMEM scratch (padded hidden state, persists across grid steps).
    c_ref   : (2B, H)  f32 VMEM scratch (cell state, persists across grid steps).
    """
    t_chunk, b2, g4 = gin_ref.shape
    h_dim = g4 // 4
    b = b2 // 2

    @pl.when(pl.program_id(0) == 0)
    def _init():
        h_ref[...] = jnp.zeros_like(h_ref)
        c_ref[...] = jnp.zeros_like(c_ref)

    whh = whh_ref[...]                                    # resident for every step of the chunk

    # Hoisted constant tiles (built once per chunk, reused every step).
    col = lax.broadcasted_iota(jnp.int32, (b2, g4), 1)
    is_g = (col >= 2 * h_dim) & (col < 3 * h_dim)         # tanh-gate columns
    # Single transcendental per gate tile: sigmoid(x) = 0.5 * (1 + tanh(x / 2)).
    pre_scale = jnp.where(is_g, 1.0, 0.5)
    post_scale = jnp.where(is_g, 1.0, 0.5)
    post_shift = jnp.where(is_g, 0.0, 0.5)
    # Padded-h mask: forward rows live in cols [0:H], backward rows in cols [H:2H].
    row2 = lax.broadcasted_iota(jnp.int32, (b2, 2 * h_dim), 0)
    col2 = lax.broadcasted_iota(jnp.int32, (b2, 2 * h_dim), 1)
    dir_mask = (row2 < b) == (col2 < h_dim)

    def step(s, carry):
        h_pad, c = carry                                  # (2B, 2H), (2B, H)
        gates = gin_ref[s] + jnp.dot(h_pad, whh,          # ONE MXU push: (2B,2H)x(2H,4H)
                                     preferred_element_type=jnp.float32)
        act = post_scale * jnp.tanh(gates * pre_scale) + post_shift
        i = act[:, 0 * h_dim:1 * h_dim]
        f = act[:, 1 * h_dim:2 * h_dim]
        g = act[:, 2 * h_dim:3 * h_dim]
        o = act[:, 3 * h_dim:4 * h_dim]
        c_new = f * c + i * g
        h_new = o * jnp.tanh(c_new)                       # (2B, H) dense
        h_pad_new = jnp.where(dir_mask,
                              jnp.concatenate([h_new, h_new], axis=1), 0.0)
        return h_pad_new, c_new

    # Moderate unroll only: full unroll just for short chunks (per review).
    unroll = True if t_chunk <= 16 else 8
    h_pad, c = lax.fori_loop(0, t_chunk, step, (h_ref[...], c_ref[...]), unroll=unroll)
    h_ref[...] = h_pad
    c_ref[...] = c

    @pl.when(pl.program_id(0) == pl.num_programs(0) - 1)
    def _head():
        # hn[0] = layer-0 forward final state, hn[1] = layer-0 backward final state.
        h_fwd = h_pad[:b, :h_dim]                         # (B, H)
        h_bwd = h_pad[b:, h_dim:]                         # (B, H)
        feat = jnp.concatenate([h_fwd, h_bwd], axis=1)    # (B, 2H)
        # Head on the VPU (sum of products), not an N=1 MXU matmul.
        logit = jnp.sum(feat * wlin_ref[...], axis=-1, keepdims=True) + blin_ref[...]
        out_ref[...] = jax.nn.sigmoid(logit)              # (B, 1)


def _pick_time_chunk(seq_len, batch, hidden, per_buffer_bytes=2 * 1024 * 1024):
    """Largest divisor of seq_len whose (Tt, 2B, 4H) f32 gin block fits the per-buffer budget.

    Pallas double-buffers the gin stream, so resident gin VMEM is ~2x this; a 2 MiB/buffer
    budget keeps the kernel comfortably inside the default scoped-VMEM limits on v5e (16 MiB),
    v6e (32 MiB) and v7x (32 MiB scoped of 64 MiB physical).
    """
    step_bytes = 2 * batch * 4 * hidden * 4
    chunk = 1
    for d in range(1, seq_len + 1):
        if seq_len % d == 0 and d * step_bytes <= per_buffer_bytes:
            chunk = d
    return chunk


def bilstm_sentiment_forward(x_word, x_tag, params, *, t_chunk=None, proj_dtype=jnp.bfloat16):
    """Forward pass matching the PyTorch module in eval mode.

    XLA glue: direction-stacked embedding gather (backward time-reversal baked into the int32
    gather indices — free) and ONE hoisted input-projection GEMM (bf16 in, f32 accumulate by
    default) that emits the gate inputs already in the kernel's (T, 2B, 4H) layout via a
    zero-padded-K weight stack.  The serial recurrence + linear head + sigmoid run inside one
    Pallas kernel, tiled over time so the gin stream DMA overlaps the recurrence while h/c
    persist in VMEM scratch.
    """
    batch, seq_len = x_word.shape
    hidden = params["whh_f"].shape[0]

    # --- direction-stacked, time-major token indices (int ops only) ---
    idx_w_fwd, idx_t_fwd = x_word.T, x_tag.T                       # (T, B)
    idx_w_bwd, idx_t_bwd = x_word[:, ::-1].T, x_tag[:, ::-1].T     # (T, B) reversed time

    def embed(idx_w, idx_t):
        return jnp.concatenate([jnp.take(params["word_emb"], idx_w, axis=0),
                                jnp.take(params["tag_emb"], idx_t, axis=0)], axis=-1)

    x_fwd = embed(idx_w_fwd, idx_t_fwd)                            # (T, B, I)
    x_bwd = embed(idx_w_bwd, idx_t_bwd)                            # (T, B, I)
    # Eval-mode F.dropout == identity.
    # TODO(synk): training-mode dropout (Bernoulli mask on rnn_input) not implemented.

    # --- zero-padded K so ONE GEMM serves both directions and emits the kernel layout ---
    #   rows [0:B]  : [x_fwd | 0    ] @ [Wih_f ; Wih_b] = x_fwd @ Wih_f
    #   rows [B:2B] : [0     | x_bwd] @ [Wih_f ; Wih_b] = x_bwd @ Wih_b
    zeros = jnp.zeros_like(x_fwd)
    x_stacked = jnp.concatenate(
        [jnp.concatenate([x_fwd, zeros], axis=-1),
         jnp.concatenate([zeros, x_bwd], axis=-1)], axis=1)        # (T, 2B, 2I)
    wih_k = jnp.concatenate([params["wih_f"], params["wih_b"]], axis=0)   # (2I, 4H)
    bias = jnp.concatenate([jnp.broadcast_to(params["b_f"], (batch, 4 * hidden)),
                            jnp.broadcast_to(params["b_b"], (batch, 4 * hidden))], axis=0)

    lhs = x_stacked.reshape(seq_len * 2 * batch, x_stacked.shape[-1])
    if proj_dtype == jnp.float32:
        gin = jnp.dot(lhs, wih_k, precision=lax.Precision.HIGHEST)
    else:
        gin = jnp.dot(lhs.astype(proj_dtype), wih_k.astype(proj_dtype),
                      preferred_element_type=jnp.float32)
    gin = gin.reshape(seq_len, 2 * batch, 4 * hidden) + bias[None]        # (T, 2B, 4H) f32

    whh_k = jnp.concatenate([params["whh_f"], params["whh_b"]], axis=0)   # (2H, 4H)
    wlin_row = params["wlin"].reshape(1, 2 * hidden)                      # (1, 2H)
    blin = params["blin"]                                                 # (1, 1)

    if t_chunk is None:
        t_chunk = _pick_time_chunk(seq_len, batch, hidden)
    if seq_len % t_chunk != 0:
        raise ValueError("t_chunk must divide the sequence length")
    num_chunks = seq_len // t_chunk

    out = pl.pallas_call(
        _bilstm_recurrence_kernel,
        out_shape=jax.ShapeDtypeStruct((batch, 1), jnp.float32),
        grid=(num_chunks,),
        in_specs=[
            pl.BlockSpec((t_chunk, 2 * batch, 4 * hidden), lambda t: (t, 0, 0)),
            pl.BlockSpec((2 * hidden, 4 * hidden), lambda t: (0, 0)),
            pl.BlockSpec((1, 2 * hidden), lambda t: (0, 0)),
            pl.BlockSpec((1, 1), lambda t: (0, 0)),
        ],
        out_specs=pl.BlockSpec((batch, 1), lambda t: (0, 0)),
        scratch_shapes=[
            pltpu.VMEM((2 * batch, 2 * hidden), jnp.float32),   # padded h (persists)
            pltpu.VMEM((2 * batch, hidden), jnp.float32),       # c        (persists)
        ],
        compiler_params=pltpu.CompilerParams(dimension_semantics=("arbitrary",)),
    )(gin, whh_k, wlin_row, blin)
    return out[:, 0]                                                       # (B,)


def _reference_forward(x_word, x_tag, params, proj_dtype=jnp.float32):
    """Pure-JAX reference (PyTorch eval-mode semantics).  proj_dtype selects the input-
    projection precision so the bf16 kernel path can be validated apples-to-apples; the
    recurrence itself is always full f32."""
    w_emb = jnp.take(params["word_emb"], x_word, axis=0)
    t_emb = jnp.take(params["tag_emb"], x_tag, axis=0)
    x = jnp.concatenate([w_emb, t_emb], axis=-1).astype(jnp.float32)   # (B, T, I)
    batch, _, _ = x.shape
    hidden = params["whh_f"].shape[0]

    def project(xs, wih, b):
        if proj_dtype == jnp.float32:
            return jnp.dot(xs, wih, precision=lax.Precision.HIGHEST) + b
        return jnp.dot(xs.astype(proj_dtype), wih.astype(proj_dtype),
                       preferred_element_type=jnp.float32) + b

    def run_dir(xs, wih, whh, b):
        gin = project(xs, wih, b)                                      # (B, T, 4H)

        def step(carry, gt):
            h, c = carry
            gates = gt + jnp.dot(h, whh, precision=lax.Precision.HIGHEST)
            i = jax.nn.sigmoid(gates[:, 0 * hidden:1 * hidden])
            f = jax.nn.sigmoid(gates[:, 1 * hidden:2 * hidden])
            g = jnp.tanh(gates[:, 2 * hidden:3 * hidden])
            o = jax.nn.sigmoid(gates[:, 3 * hidden:4 * hidden])
            c = f * c + i * g
            h = o * jnp.tanh(c)
            return (h, c), None

        h0 = jnp.zeros((batch, hidden), jnp.float32)
        (h, _), _ = lax.scan(step, (h0, h0), jnp.transpose(gin, (1, 0, 2)))
        return h

    h_fwd = run_dir(x, params["wih_f"], params["whh_f"], params["b_f"])
    h_bwd = run_dir(x[:, ::-1, :], params["wih_b"], params["whh_b"], params["b_b"])
    feat = jnp.concatenate([h_fwd, h_bwd], axis=-1)
    return jax.nn.sigmoid(feat @ params["wlin"] + params["blin"])[:, 0]


def init_params(key, vocab_word, vocab_tag, embedding_size, tag_size, hidden_size):
    """Deterministic synthetic parameter init (shapes match the PyTorch module)."""
    in_dim = embedding_size + tag_size
    h = hidden_size
    ks = jax.random.split(key, 12)
    bound = 1.0 / jnp.sqrt(h)
    u = lambda k, shape: jax.random.uniform(k, shape, jnp.float32, -bound, bound)
    return {
        "word_emb": jax.random.normal(ks[0], (vocab_word, embedding_size), jnp.float32),
        "tag_emb": jax.random.normal(ks[1], (vocab_tag, tag_size), jnp.float32),
        # LSTM layer-0, forward direction (pre-transposed (I,4H)/(H,4H)); bias = b_ih + b_hh
        "wih_f": u(ks[2], (in_dim, 4 * h)),
        "whh_f": u(ks[3], (h, 4 * h)),
        "b_f": u(ks[4], (1, 4 * h)) + u(ks[5], (1, 4 * h)),
        # LSTM layer-0, backward direction
        "wih_b": u(ks[6], (in_dim, 4 * h)),
        "whh_b": u(ks[7], (h, 4 * h)),
        "b_b": u(ks[8], (1, 4 * h)) + u(ks[9], (1, 4 * h)),
        # Linear(hidden*2 -> 1), pre-transposed to (2H, 1)
        "wlin": u(ks[10], (2 * h, 1)),
        "blin": u(ks[11], (1, 1)),
    }


if __name__ == "__main__":
    VOCAB_WORD, VOCAB_TAG = 50, 12
    EMB, TAG_EMB, HIDDEN = 16, 8, 32
    B, T = 2, 8

    key = jax.random.PRNGKey(0)
    k_params, k_word, k_tag = jax.random.split(key, 3)
    params = init_params(k_params, VOCAB_WORD, VOCAB_TAG, EMB, TAG_EMB, HIDDEN)

    x_word = jax.random.randint(k_word, (B, T), 0, VOCAB_WORD, dtype=jnp.int32)
    x_tag = jax.random.randint(k_tag, (B, T), 0, VOCAB_TAG, dtype=jnp.int32)

    # Fast path: bf16 input-projection GEMM, auto time chunk.
    fwd_fast = jax.jit(functools.partial(bilstm_sentiment_forward, params=params))
    out_fast = jax.block_until_ready(fwd_fast(x_word, x_tag))

    # Exactness path: f32 projection; t_chunk=4 exercises the multi-chunk h/c carry.
    fwd_f32 = jax.jit(functools.partial(bilstm_sentiment_forward, params=params,
                                        t_chunk=4, proj_dtype=jnp.float32))
    out_f32 = jax.block_until_ready(fwd_f32(x_word, x_tag))

    ref_f32 = _reference_forward(x_word, x_tag, params)
    ref_bf16 = _reference_forward(x_word, x_tag, params, proj_dtype=jnp.bfloat16)

    assert out_fast.shape == (B,)
    # Kernel recurrence/layout is exact vs the full-f32 reference.
    assert jnp.allclose(out_f32, ref_f32, rtol=1e-4, atol=1e-4), (out_f32, ref_f32)
    # bf16-projection kernel matches a reference with the identical projection quantization.
    assert jnp.allclose(out_fast, ref_bf16, rtol=1e-4, atol=1e-4), (out_fast, ref_bf16)
    # And the fast bf16 path stays close to full f32 end-to-end.
    assert jnp.allclose(out_fast, ref_f32, rtol=2e-2, atol=2e-2), (out_fast, ref_f32)

    print("KERNEL_OK")
</pallas_src>

<mosaic_0001>
module attributes {stable_mosaic.version = 11 : i64} {
  func.func @_bilstm_recurrence_kernel(%arg0: i32, %arg1: memref<8x4x128xf32, #tpu.memory_space<vmem>>, %arg2: memref<64x128xf32, #tpu.memory_space<vmem>>, %arg3: memref<1x64xf32, #tpu.memory_space<vmem>>, %arg4: memref<1x1xf32, #tpu.memory_space<vmem>>, %arg5: memref<2x1xf32, #tpu.memory_space<vmem>>, %arg6: memref<4x64xf32, #tpu.memory_space<vmem>>, %arg7: memref<4x32xf32, #tpu.memory_space<vmem>>) attributes {dimension_semantics = [#tpu.dimension_semantics<arbitrary>], iteration_bounds = array<i64: 1>, scalar_prefetch = 0 : i64, scratch_operands = 2 : i64, tpu.core_type = #tpu.core_type<tc>, window_params = [{transform_indices = @transform_0, window_bounds = array<i64: 8, 4, 128>}, {pipeline_mode = #tpu.pipeline_mode<synchronous>, transform_indices = @transform_1, window_bounds = array<i64: 64, 128>}, {pipeline_mode = #tpu.pipeline_mode<synchronous>, transform_indices = @transform_2, window_bounds = array<i64: 1, 64>}, {pipeline_mode = #tpu.pipeline_mode<synchronous>, transform_indices = @transform_3, window_bounds = array<i64: 1, 1>}, {pipeline_mode = #tpu.pipeline_mode<synchronous>, transform_indices = @transform_4, window_bounds = array<i64: 2, 1>}]} {
    %c0_i32 = arith.constant 0 : i32
    %0 = arith.cmpi eq, %arg0, %c0_i32 : i32
    %1 = arith.extui %0 : i1 to i32
    %c0_i32_0 = arith.constant 0 : i32
    %2 = arith.cmpi ne, %1, %c0_i32_0 : i32
    scf.if %2 {
      %cst_52 = arith.constant 0.000000e+00 : f32
      %202 = vector.broadcast %cst_52 : f32 to vector<4x64xf32>
      %c0_53 = arith.constant 0 : index
      %c0_54 = arith.constant 0 : index
      %203 = vector.load %arg6[%c0_53, %c0_54] : memref<4x64xf32, #tpu.memory_space<vmem>>, vector<4x64xf32>
      tpu.vector_store %arg6[%c0_53, %c0_54], %202 {strides = array<i32>} : memref<4x64xf32, #tpu.memory_space<vmem>>, vector<4x64xf32>,
      %cst_55 = arith.constant 0.000000e+00 : f32
      %204 = vector.broadcast %cst_55 : f32 to vector<4x32xf32>
      %c0_56 = arith.constant 0 : index
      %c0_57 = arith.constant 0 : index
      %205 = vector.load %arg7[%c0_56, %c0_57] : memref<4x32xf32, #tpu.memory_space<vmem>>, vector<4x32xf32>
      tpu.vector_store %arg7[%c0_56, %c0_57], %204 {strides = array<i32>} : memref<4x32xf32, #tpu.memory_space<vmem>>, vector<4x32xf32>,
    } else {
    }
    %c0 = arith.constant 0 : index
    %c0_1 = arith.constant 0 : index
    %3 = vector.load %arg2[%c0, %c0_1] : memref<64x128xf32, #tpu.memory_space<vmem>>, vector<64x128xf32>
    %4 = tpu.iota {dimensions = array<i32: 1>} : vector<4x128xi32>
    %c64_i32 = arith.constant 64 : i32
    %5 = vector.broadcast %c64_i32 : i32 to vector<4x128xi32>
    %6 = arith.cmpi sge, %4, %5 : vector<4x128xi32>
    %c96_i32 = arith.constant 96 : i32
    %7 = vector.broadcast %c96_i32 : i32 to vector<4x128xi32>
    %8 = arith.cmpi slt, %4, %7 : vector<4x128xi32>
    %9 = arith.andi %6, %8 : vector<4x128xi1>
    %cst = arith.constant 1.000000e+00 : f32
    %cst_2 = arith.constant 5.000000e-01 : f32
    %10 = vector.broadcast %cst : f32 to vector<4x128xf32>
    %11 = vector.broadcast %cst_2 : f32 to vector<4x128xf32>
    %12 = arith.select %9, %10, %11 : vector<4x128xi1>, vector<4x128xf32>
    %cst_3 = arith.constant 1.000000e+00 : f32
    %cst_4 = arith.constant 5.000000e-01 : f32
    %13 = vector.broadcast %cst_3 : f32 to vector<4x128xf32>
    %14 = vector.broadcast %cst_4 : f32 to vector<4x128xf32>
    %15 = arith.select %9, %13, %14 : vector<4x128xi1>, vector<4x128xf32>
    %cst_5 = arith.constant 0.000000e+00 : f32
    %cst_6 = arith.constant 5.000000e-01 : f32
    %16 = vector.broadcast %cst_5 : f32 to vector<4x128xf32>
    %17 = vector.broadcast %cst_6 : f32 to vector<4x128xf32>
    %18 = arith.select %9, %16, %17 : vector<4x128xi1>, vector<4x128xf32>
    %19 = tpu.iota {dimensions = array<i32: 0>} : vector<4x64xi32>
    %20 = tpu.iota {dimensions = array<i32: 1>} : vector<4x64xi32>
    %c2_i32 = arith.constant 2 : i32
    %21 = vector.broadcast %c2_i32 : i32 to vector<4x64xi32>
    %22 = arith.cmpi slt, %19, %21 : vector<4x64xi32>
    %c32_i32 = arith.constant 32 : i32
    %23 = vector.broadcast %c32_i32 : i32 to vector<4x64xi32>
    %24 = arith.cmpi slt, %20, %23 : vector<4x64xi32>
    %25 = arith.xori %22, %24 : vector<4x64xi1>
    %cst_7 = arith.constant dense<true> : vector<4x64xi1>
    %26 = arith.xori %25, %cst_7 : vector<4x64xi1>
    %c0_8 = arith.constant 0 : index
    %c0_9 = arith.constant 0 : index
    %27 = vector.load %arg6[%c0_8, %c0_9] : memref<4x64xf32, #tpu.memory_space<vmem>>, vector<4x64xf32>
    %c0_10 = arith.constant 0 : index
    %c0_11 = arith.constant 0 : index
    %28 = vector.load %arg7[%c0_10, %c0_11] : memref<4x32xf32, #tpu.memory_space<vmem>>, vector<4x32xf32>
    %c0_i32_12 = arith.constant 0 : i32
    %29 = arith.index_cast %c0_i32_12 : i32 to index
    %c0_13 = arith.constant 0 : index
    %c0_14 = arith.constant 0 : index
    %30 = vector.load %arg1[%29, %c0_13, %c0_14] : memref<8x4x128xf32, #tpu.memory_space<vmem>>, vector<1x4x128xf32>
    %31 = vector.shape_cast %30 : vector<1x4x128xf32> to vector<4x128xf32>
    %cst_15 = arith.constant dense<0.000000e+00> : vector<4x128xf32>
    %32 = tpu.matmul %27, %3, %cst_15 {dimension_numbers = #tpu.dot_dimension_numbers<[1], [0], [0], [1], [0, 0, 1, 1], [], []>} : vector<4x64xf32>, vector<64x128xf32>, vector<4x128xf32> -> vector<4x128xf32>
    %33 = arith.addf %31, %32 : vector<4x128xf32>
    %34 = arith.mulf %33, %12 : vector<4x128xf32>
    %35 = math.tanh %34 : vector<4x128xf32>
    %36 = arith.mulf %15, %35 : vector<4x128xf32>
    %37 = arith.addf %36, %18 : vector<4x128xf32>
    %38 = vector.extract_strided_slice %37 {offsets = [0, 0], sizes = [4, 32], strides = [1, 1]} : vector<4x128xf32> to vector<4x32xf32>
    %39 = vector.extract_strided_slice %37 {offsets = [0, 32], sizes = [4, 32], strides = [1, 1]} : vector<4x128xf32> to vector<4x32xf32>
    %40 = vector.extract_strided_slice %37 {offsets = [0, 64], sizes = [4, 32], strides = [1, 1]} : vector<4x128xf32> to vector<4x32xf32>
    %41 = vector.extract_strided_slice %37 {offsets = [0, 96], sizes = [4, 32], strides = [1, 1]} : vector<4x128xf32> to vector<4x32xf32>
    %42 = arith.mulf %39, %28 : vector<4x32xf32>
    %43 = arith.mulf %38, %40 : vector<4x32xf32>
    %44 = arith.addf %42, %43 : vector<4x32xf32>
    %45 = math.tanh %44 : vector<4x32xf32>
    %46 = arith.mulf %41, %45 : vector<4x32xf32>
    %47 = tpu.concatenate %46, %46 in 1 : vector<4x32xf32>, vector<4x32xf32> -> vector<4x64xf32>
    %cst_16 = arith.constant 0.000000e+00 : f32
    %48 = vector.broadcast %cst_16 : f32 to vector<4x64xf32>
    %49 = arith.select %26, %47, %48 : vector<4x64xi1>, vector<4x64xf32>
    %c1_i32 = arith.constant 1 : i32
    %50 = arith.index_cast %c1_i32 : i32 to index
    %c0_17 = arith.constant 0 : index
    %c0_18 = arith.constant 0 : index
    %51 = vector.load %arg1[%50, %c0_17, %c0_18] : memref<8x4x128xf32, #tpu.memory_space<vmem>>, vector<1x4x128xf32>
    %52 = vector.shape_cast %51 : vector<1x4x128xf32> to vector<4x128xf32>
    %cst_19 = arith.constant dense<0.000000e+00> : vector<4x128xf32>
    %53 = tpu.matmul %49, %3, %cst_19 {dimension_numbers = #tpu.dot_dimension_numbers<[1], [0], [0], [1], [0, 0, 1, 1], [], []>} : vector<4x64xf32>, vector<64x128xf32>, vector<4x128xf32> -> vector<4x128xf32>
    %54 = arith.addf %52, %53 : vector<4x128xf32>
    %55 = arith.mulf %54, %12 : vector<4x128xf32>
    %56 = math.tanh %55 : vector<4x128xf32>
    %57 = arith.mulf %15, %56 : vector<4x128xf32>
    %58 = arith.addf %57, %18 : vector<4x128xf32>
    %59 = vector.extract_strided_slice %58 {offsets = [0, 0], sizes = [4, 32], strides = [1, 1]} : vector<4x128xf32> to vector<4x32xf32>
    %60 = vector.extract_strided_slice %58 {offsets = [0, 32], sizes = [4, 32], strides = [1, 1]} : vector<4x128xf32> to vector<4x32xf32>
    %61 = vector.extract_strided_slice %58 {offsets = [0, 64], sizes = [4, 32], strides = [1, 1]} : vector<4x128xf32> to vector<4x32xf32>
    %62 = vector.extract_strided_slice %58 {offsets = [0, 96], sizes = [4, 32], strides = [1, 1]} : vector<4x128xf32> to vector<4x32xf32>
    %63 = arith.mulf %60, %44 : vector<4x32xf32>
    %64 = arith.mulf %59, %61 : vector<4x32xf32>
    %65 = arith.addf %63, %64 : vector<4x32xf32>
    %66 = math.tanh %65 : vector<4x32xf32>
    %67 = arith.mulf %62, %66 : vector<4x32xf32>
    %68 = tpu.concatenate %67, %67 in 1 : vector<4x32xf32>, vector<4x32xf32> -> vector<4x64xf32>
    %cst_20 = arith.constant 0.000000e+00 : f32
    %69 = vector.broadcast %cst_20 : f32 to vector<4x64xf32>
    %70 = arith.select %26, %68, %69 : vector<4x64xi1>, vector<4x64xf32>
    %c2_i32_21 = arith.constant 2 : i32
    %71 = arith.index_cast %c2_i32_21 : i32 to index
    %c0_22 = arith.constant 0 : index
    %c0_23 = arith.constant 0 : index
    %72 = vector.load %arg1[%71, %c0_22, %c0_23] : memref<8x4x128xf32, #tpu.memory_space<vmem>>, vector<1x4x128xf32>
    %73 = vector.shape_cast %72 : vector<1x4x128xf32> to vector<4x128xf32>
    %cst_24 = arith.constant dense<0.000000e+00> : vector<4x128xf32>
    %74 = tpu.matmul %70, %3, %cst_24 {dimension_numbers = #tpu.dot_dimension_numbers<[1], [0], [0], [1], [0, 0, 1, 1], [], []>} : vector<4x64xf32>, vector<64x128xf32>, vector<4x128xf32> -> vector<4x128xf32>
    %75 = arith.addf %73, %74 : vector<4x128xf32>
    %76 = arith.mulf %75, %12 : vector<4x128xf32>
    %77 = math.tanh %76 : vector<4x128xf32>
    %78 = arith.mulf %15, %77 : vector<4x128xf32>
    %79 = arith.addf %78, %18 : vector<4x128xf32>
    %80 = vector.extract_strided_slice %79 {offsets = [0, 0], sizes = [4, 32], strides = [1, 1]} : vector<4x128xf32> to vector<4x32xf32>
    %81 = vector.extract_strided_slice %79 {offsets = [0, 32], sizes = [4, 32], strides = [1, 1]} : vector<4x128xf32> to vector<4x32xf32>
    %82 = vector.extract_strided_slice %79 {offsets = [0, 64], sizes = [4, 32], strides = [1, 1]} : vector<4x128xf32> to vector<4x32xf32>
    %83 = vector.extract_strided_slice %79 {offsets = [0, 96], sizes = [4, 32], strides = [1, 1]} : vector<4x128xf32> to vector<4x32xf32>
    %84 = arith.mulf %81, %65 : vector<4x32xf32>
    %85 = arith.mulf %80, %82 : vector<4x32xf32>
    %86 = arith.addf %84, %85 : vector<4x32xf32>
    %87 = math.tanh %86 : vector<4x32xf32>
    %88 = arith.mulf %83, %87 : vector<4x32xf32>
    %89 = tpu.concatenate %88, %88 in 1 : vector<4x32xf32>, vector<4x32xf32> -> vector<4x64xf32>
    %cst_25 = arith.constant 0.000000e+00 : f32
    %90 = vector.broadcast %cst_25 : f32 to vector<4x64xf32>
    %91 = arith.select %26, %89, %90 : vector<4x64xi1>, vector<4x64xf32>
    %c3_i32 = arith.constant 3 : i32
    %92 = arith.index_cast %c3_i32 : i32 to index
    %c0_26 = arith.constant 0 : index
    %c0_27 = arith.constant 0 : index
    %93 = vector.load %arg1[%92, %c0_26, %c0_27] : memref<8x4x128xf32, #tpu.memory_space<vmem>>, vector<1x4x128xf32>
    %94 = vector.shape_cast %93 : vector<1x4x128xf32> to vector<4x128xf32>
    %cst_28 = arith.constant dense<0.000000e+00> : vector<4x128xf32>
    %95 = tpu.matmul %91, %3, %cst_28 {dimension_numbers = #tpu.dot_dimension_numbers<[1], [0], [0], [1], [0, 0, 1, 1], [], []>} : vector<4x64xf32>, vector<64x128xf32>, vector<4x128xf32> -> vector<4x128xf32>
    %96 = arith.addf %94, %95 : vector<4x128xf32>
    %97 = arith.mulf %96, %12 : vector<4x128xf32>
    %98 = math.tanh %97 : vector<4x128xf32>
    %99 = arith.mulf %15, %98 : vector<4x128xf32>
    %100 = arith.addf %99, %18 : vector<4x128xf32>
    %101 = vector.extract_strided_slice %100 {offsets = [0, 0], sizes = [4, 32], strides = [1, 1]} : vector<4x128xf32> to vector<4x32xf32>
    %102 = vector.extract_strided_slice %100 {offsets = [0, 32], sizes = [4, 32], strides = [1, 1]} : vector<4x128xf32> to vector<4x32xf32>
    %103 = vector.extract_strided_slice %100 {offsets = [0, 64], sizes = [4, 32], strides = [1, 1]} : vector<4x128xf32> to vector<4x32xf32>
    %104 = vector.extract_strided_slice %100 {offsets = [0, 96], sizes = [4, 32], strides = [1, 1]} : vector<4x128xf32> to vector<4x32xf32>
    %105 = arith.mulf %102, %86 : vector<4x32xf32>
    %106 = arith.mulf %101, %103 : vector<4x32xf32>
    %107 = arith.addf %105, %106 : vector<4x32xf32>
    %108 = math.tanh %107 : vector<4x32xf32>
    %109 = arith.mulf %104, %108 : vector<4x32xf32>
    %110 = tpu.concatenate %109, %109 in 1 : vector<4x32xf32>, vector<4x32xf32> -> vector<4x64xf32>
    %cst_29 = arith.constant 0.000000e+00 : f32
    %111 = vector.broadcast %cst_29 : f32 to vector<4x64xf32>
    %112 = arith.select %26, %110, %111 : vector<4x64xi1>, vector<4x64xf32>
    %c4_i32 = arith.constant 4 : i32
    %113 = arith.index_cast %c4_i32 : i32 to index
    %c0_30 = arith.constant 0 : index
    %c0_31 = arith.constant 0 : index
    %114 = vector.load %arg1[%113, %c0_30, %c0_31] : memref<8x4x128xf32, #tpu.memory_space<vmem>>, vector<1x4x128xf32>
    %115 = vector.shape_cast %114 : vector<1x4x128xf32> to vector<4x128xf32>
    %cst_32 = arith.constant dense<0.000000e+00> : vector<4x128xf32>
    %116 = tpu.matmul %112, %3, %cst_32 {dimension_numbers = #tpu.dot_dimension_numbers<[1], [0], [0], [1], [0, 0, 1, 1], [], []>} : vector<4x64xf32>, vector<64x128xf32>, vector<4x128xf32> -> vector<4x128xf32>
    %117 = arith.addf %115, %116 : vector<4x128xf32>
    %118 = arith.mulf %117, %12 : vector<4x128xf32>
    %119 = math.tanh %118 : vector<4x128xf32>
    %120 = arith.mulf %15, %119 : vector<4x128xf32>
    %121 = arith.addf %120, %18 : vector<4x128xf32>
    %122 = vector.extract_strided_slice %121 {offsets = [0, 0], sizes = [4, 32], strides = [1, 1]} : vector<4x128xf32> to vector<4x32xf32>
    %123 = vector.extract_strided_slice %121 {offsets = [0, 32], sizes = [4, 32], strides = [1, 1]} : vector<4x128xf32> to vector<4x32xf32>
    %124 = vector.extract_strided_slice %121 {offsets = [0, 64], sizes = [4, 32], strides = [1, 1]} : vector<4x128xf32> to vector<4x32xf32>
    %125 = vector.extract_strided_slice %121 {offsets = [0, 96], sizes = [4, 32], strides = [1, 1]} : vector<4x128xf32> to vector<4x32xf32>
    %126 = arith.mulf %123, %107 : vector<4x32xf32>
    %127 = arith.mulf %122, %124 : vector<4x32xf32>
    %128 = arith.addf %126, %127 : vector<4x32xf32>
    %129 = math.tanh %128 : vector<4x32xf32>
    %130 = arith.mulf %125, %129 : vector<4x32xf32>
    %131 = tpu.concatenate %130, %130 in 1 : vector<4x32xf32>, vector<4x32xf32> -> vector<4x64xf32>
    %cst_33 = arith.constant 0.000000e+00 : f32
    %132 = vector.broadcast %cst_33 : f32 to vector<4x64xf32>
    %133 = arith.select %26, %131, %132 : vector<4x64xi1>, vector<4x64xf32>
    %c5_i32 = arith.constant 5 : i32
    %134 = arith.index_cast %c5_i32 : i32 to index
    %c0_34 = arith.constant 0 : index
    %c0_35 = arith.constant 0 : index
    %135 = vector.load %arg1[%134, %c0_34, %c0_35] : memref<8x4x128xf32, #tpu.memory_space<vmem>>, vector<1x4x128xf32>
    %136 = vector.shape_cast %135 : vector<1x4x128xf32> to vector<4x128xf32>
    %cst_36 = arith.constant dense<0.000000e+00> : vector<4x128xf32>
    %137 = tpu.matmul %133, %3, %cst_36 {dimension_numbers = #tpu.dot_dimension_numbers<[1], [0], [0], [1], [0, 0, 1, 1], [], []>} : vector<4x64xf32>, vector<64x128xf32>, vector<4x128xf32> -> vector<4x128xf32>
    %138 = arith.addf %136, %137 : vector<4x128xf32>
    %139 = arith.mulf %138, %12 : vector<4x128xf32>
    %140 = math.tanh %139 : vector<4x128xf32>
    %141 = arith.mulf %15, %140 : vector<4x128xf32>
    %142 = arith.addf %141, %18 : vector<4x128xf32>
    %143 = vector.extract_strided_slice %142 {offsets = [0, 0], sizes = [4, 32], strides = [1, 1]} : vector<4x128xf32> to vector<4x32xf32>
    %144 = vector.extract_strided_slice %142 {offsets = [0, 32], sizes = [4, 32], strides = [1, 1]} : vector<4x128xf32> to vector<4x32xf32>
    %145 = vector.extract_strided_slice %142 {offsets = [0, 64], sizes = [4, 32], strides = [1, 1]} : vector<4x128xf32> to vector<4x32xf32>
    %146 = vector.extract_strided_slice %142 {offsets = [0, 96], sizes = [4, 32], strides = [1, 1]} : vector<4x128xf32> to vector<4x32xf32>
    %147 = arith.mulf %144, %128 : vector<4x32xf32>
    %148 = arith.mulf %143, %145 : vector<4x32xf32>
    %149 = arith.addf %147, %148 : vector<4x32xf32>
    %150 = math.tanh %149 : vector<4x32xf32>
    %151 = arith.mulf %146, %150 : vector<4x32xf32>
    %152 = tpu.concatenate %151, %151 in 1 : vector<4x32xf32>, vector<4x32xf32> -> vector<4x64xf32>
    %cst_37 = arith.constant 0.000000e+00 : f32
    %153 = vector.broadcast %cst_37 : f32 to vector<4x64xf32>
    %154 = arith.select %26, %152, %153 : vector<4x64xi1>, vector<4x64xf32>
    %c6_i32 = arith.constant 6 : i32
    %155 = arith.index_cast %c6_i32 : i32 to index
    %c0_38 = arith.constant 0 : index
    %c0_39 = arith.constant 0 : index
    %156 = vector.load %arg1[%155, %c0_38, %c0_39] : memref<8x4x128xf32, #tpu.memory_space<vmem>>, vector<1x4x128xf32>
    %157 = vector.shape_cast %156 : vector<1x4x128xf32> to vector<4x128xf32>
    %cst_40 = arith.constant dense<0.000000e+00> : vector<4x128xf32>
    %158 = tpu.matmul %154, %3, %cst_40 {dimension_numbers = #tpu.dot_dimension_numbers<[1], [0], [0], [1], [0, 0, 1, 1], [], []>} : vector<4x64xf32>, vector<64x128xf32>, vector<4x128xf32> -> vector<4x128xf32>
    %159 = arith.addf %157, %158 : vector<4x128xf32>
    %160 = arith.mulf %159, %12 : vector<4x128xf32>
    %161 = math.tanh %160 : vector<4x128xf32>
    %162 = arith.mulf %15, %161 : vector<4x128xf32>
    %163 = arith.addf %162, %18 : vector<4x128xf32>
    %164 = vector.extract_strided_slice %163 {offsets = [0, 0], sizes = [4, 32], strides = [1, 1]} : vector<4x128xf32> to vector<4x32xf32>
    %165 = vector.extract_strided_slice %163 {offsets = [0, 32], sizes = [4, 32], strides = [1, 1]} : vector<4x128xf32> to vector<4x32xf32>
    %166 = vector.extract_strided_slice %163 {offsets = [0, 64], sizes = [4, 32], strides = [1, 1]} : vector<4x128xf32> to vector<4x32xf32>
    %167 = vector.extract_strided_slice %163 {offsets = [0, 96], sizes = [4, 32], strides = [1, 1]} : vector<4x128xf32> to vector<4x32xf32>
    %168 = arith.mulf %165, %149 : vector<4x32xf32>
    %169 = arith.mulf %164, %166 : vector<4x32xf32>
    %170 = arith.addf %168, %169 : vector<4x32xf32>
    %171 = math.tanh %170 : vector<4x32xf32>
    %172 = arith.mulf %167, %171 : vector<4x32xf32>
    %173 = tpu.concatenate %172, %172 in 1 : vector<4x32xf32>, vector<4x32xf32> -> vector<4x64xf32>
    %cst_41 = arith.constant 0.000000e+00 : f32
    %174 = vector.broadcast %cst_41 : f32 to vector<4x64xf32>
    %175 = arith.select %26, %173, %174 : vector<4x64xi1>, vector<4x64xf32>
    %c7_i32 = arith.constant 7 : i32
    %176 = arith.index_cast %c7_i32 : i32 to index
    %c0_42 = arith.constant 0 : index
    %c0_43 = arith.constant 0 : index
    %177 = vector.load %arg1[%176, %c0_42, %c0_43] : memref<8x4x128xf32, #tpu.memory_space<vmem>>, vector<1x4x128xf32>
    %178 = vector.shape_cast %177 : vector<1x4x128xf32> to vector<4x128xf32>
    %cst_44 = arith.constant dense<0.000000e+00> : vector<4x128xf32>
    %179 = tpu.matmul %175, %3, %cst_44 {dimension_numbers = #tpu.dot_dimension_numbers<[1], [0], [0], [1], [0, 0, 1, 1], [], []>} : vector<4x64xf32>, vector<64x128xf32>, vector<4x128xf32> -> vector<4x128xf32>
    %180 = arith.addf %178, %179 : vector<4x128xf32>
    %181 = arith.mulf %180, %12 : vector<4x128xf32>
    %182 = math.tanh %181 : vector<4x128xf32>
    %183 = arith.mulf %15, %182 : vector<4x128xf32>
    %184 = arith.addf %183, %18 : vector<4x128xf32>
    %185 = vector.extract_strided_slice %184 {offsets = [0, 0], sizes = [4, 32], strides = [1, 1]} : vector<4x128xf32> to vector<4x32xf32>
    %186 = vector.extract_strided_slice %184 {offsets = [0, 32], sizes = [4, 32], strides = [1, 1]} : vector<4x128xf32> to vector<4x32xf32>
    %187 = vector.extract_strided_slice %184 {offsets = [0, 64], sizes = [4, 32], strides = [1, 1]} : vector<4x128xf32> to vector<4x32xf32>
    %188 = vector.extract_strided_slice %184 {offsets = [0, 96], sizes = [4, 32], strides = [1, 1]} : vector<4x128xf32> to vector<4x32xf32>
    %189 = arith.mulf %186, %170 : vector<4x32xf32>
    %190 = arith.mulf %185, %187 : vector<4x32xf32>
    %191 = arith.addf %189, %190 : vector<4x32xf32>
    %192 = math.tanh %191 : vector<4x32xf32>
    %193 = arith.mulf %188, %192 : vector<4x32xf32>
    %194 = tpu.concatenate %193, %193 in 1 : vector<4x32xf32>, vector<4x32xf32> -> vector<4x64xf32>
    %cst_45 = arith.constant 0.000000e+00 : f32
    %195 = vector.broadcast %cst_45 : f32 to vector<4x64xf32>
    %196 = arith.select %26, %194, %195 : vector<4x64xi1>, vector<4x64xf32>
    %c8_i32 = arith.constant 8 : i32
    %c0_46 = arith.constant 0 : index
    %c0_47 = arith.constant 0 : index
    %197 = vector.load %arg6[%c0_46, %c0_47] : memref<4x64xf32, #tpu.memory_space<vmem>>, vector<4x64xf32>
    tpu.vector_store %arg6[%c0_46, %c0_47], %196 {strides = array<i32>} : memref<4x64xf32, #tpu.memory_space<vmem>>, vector<4x64xf32>,
    %c0_48 = arith.constant 0 : index
    %c0_49 = arith.constant 0 : index
    %198 = vector.load %arg7[%c0_48, %c0_49] : memref<4x32xf32, #tpu.memory_space<vmem>>, vector<4x32xf32>
    tpu.vector_store %arg7[%c0_48, %c0_49], %191 {strides = array<i32>} : memref<4x32xf32, #tpu.memory_space<vmem>>, vector<4x32xf32>,
    %c0_i32_50 = arith.constant 0 : i32
    %199 = arith.cmpi eq, %arg0, %c0_i32_50 : i32
    %200 = arith.extui %199 : i1 to i32
    %c0_i32_51 = arith.constant 0 : i32
    %201 = arith.cmpi ne, %200, %c0_i32_51 : i32
    scf.if %201 {
      %202 = vector.extract_strided_slice %196 {offsets = [0, 0], sizes = [2, 32], strides = [1, 1]} : vector<4x64xf32> to vector<2x32xf32>
      %203 = vector.extract_strided_slice %196 {offsets = [2, 32], sizes = [2, 32], strides = [1, 1]} : vector<4x64xf32> to vector<2x32xf32>
      %204 = tpu.concatenate %202, %203 in 1 : vector<2x32xf32>, vector<2x32xf32> -> vector<2x64xf32>
      %c0_52 = arith.constant 0 : index
      %c0_53 = arith.constant 0 : index
      %205 = vector.load %arg3[%c0_52, %c0_53] : memref<1x64xf32, #tpu.memory_space<vmem>>, vector<1x64xf32>
      %206 = vector.broadcast %205 : vector<1x64xf32> to vector<2x64xf32>
      %207 = arith.mulf %204, %206 : vector<2x64xf32>
      %cst_54 = arith.constant dense<0.000000e+00> : vector<2xf32>
      %208 = vector.multi_reduction <add>, %207, %cst_54 [1] : vector<2x64xf32> to vector<2xf32>
      %209 = vector.shape_cast %208 : vector<2xf32> to vector<2x1xf32>
      %c0_55 = arith.constant 0 : index
      %c0_56 = arith.constant 0 : index
      %210 = vector.load %arg4[%c0_55, %c0_56] : memref<1x1xf32, #tpu.memory_space<vmem>>, vector<1x1xf32>
      %211 = vector.broadcast %210 : vector<1x1xf32> to vector<2x1xf32>
      %212 = arith.addf %209, %211 : vector<2x1xf32>
      %213 = arith.negf %212 : vector<2x1xf32>
      %214 = math.exp %213 : vector<2x1xf32>
      %cst_57 = arith.constant 1.000000e+00 : f32
      %215 = vector.broadcast %cst_57 : f32 to vector<2x1xf32>
      %216 = arith.addf %215, %214 : vector<2x1xf32>
      %217 = arith.divf %215, %216 : vector<2x1xf32>
      %c0_58 = arith.constant 0 : index
      %c0_59 = arith.constant 0 : index
      %218 = vector.load %arg5[%c0_58, %c0_59] : memref<2x1xf32, #tpu.memory_space<vmem>>, vector<2x1xf32>
      tpu.vector_store %arg5[%c0_58, %c0_59], %217 {strides = array<i32>} : memref<2x1xf32, #tpu.memory_space<vmem>>, vector<2x1xf32>,
    } else {
    }
    return
  }
  func.func @transform_0(%arg0: i32) -> (i32, i32, i32) {
    %c0_i32 = arith.constant 0 : i32
    %c0_i32_0 = arith.constant 0 : i32
    %c0_i32_1 = arith.constant 0 : i32
    return %arg0, %c0_i32, %c0_i32_0 : i32, i32, i32
  }
  func.func @transform_1(%arg0: i32) -> (i32, i32) {
    %c0_i32 = arith.constant 0 : i32
    %c0_i32_0 = arith.constant 0 : i32
    %c0_i32_1 = arith.constant 0 : i32
    return %c0_i32, %c0_i32_0 : i32, i32
  }
  func.func @transform_2(%arg0: i32) -> (i32, i32) {
    %c0_i32 = arith.constant 0 : i32
    %c0_i32_0 = arith.constant 0 : i32
    %c0_i32_1 = arith.constant 0 : i32
    return %c0_i32, %c0_i32_0 : i32, i32
  }
  func.func @transform_3(%arg0: i32) -> (i32, i32) {
    %c0_i32 = arith.constant 0 : i32
    %c0_i32_0 = arith.constant 0 : i32
    %c0_i32_1 = arith.constant 0 : i32
    return %c0_i32, %c0_i32_0 : i32, i32
  }
  func.func @transform_4(%arg0: i32) -> (i32, i32) {
    %c0_i32 = arith.constant 0 : i32
    %c0_i32_0 = arith.constant 0 : i32
    %c0_i32_1 = arith.constant 0 : i32
    return %c0_i32, %c0_i32_0 : i32, i32
  }
}

</mosaic_0001>

<llo_original>
// kernel: bilstm_sentiment_forward.1
$region0: #{bilstm_sentiment_forward.1}
  #allocation0 [shape = 'u32[]', space=smem, size = 0x4, offset = 0x4, fixed_abs, tag = 'smem constant byte address 0x4 - core index']
  #allocation1 [shape = 'u32[72,128]{1,0:T(1,128)}', space=vmem, size = 0x9000, scoped, tag = 'internal scratch']
  #allocation2 [shape = 'f32[4,64]{1,0:T(4,128)}', space=vmem, size = 0x800, scoped, tag = 'scratch operand']
  #allocation3 [shape = 'f32[4,32]{1,0:T(4,128)}', space=vmem, size = 0x800, scoped, tag = 'scratch operand']
  #allocation4 [shape = 'f32[1,1]{1,0:T(1,128)S(1)}', space=vmem, size = 0x200, scoped, tag = 'scoped memory for bilstm_sentiment_forward.1']
  %s0 = inlined_call_operand.vmem [shape: f32[8,4,128], index: 0, kind: input, shape index: {}]
  %s1 = inlined_call_operand.vmem [shape: f32[64,128], index: 1, kind: input, shape index: {}]
  %s2 = inlined_call_operand.vmem [shape: f32[1,64], index: 2, kind: input, shape index: {}]
  %s3 = inlined_call_operand.<no memory space> [shape: f32[1,1], index: 3, kind: input, shape index: {}]
  %s4 = inlined_call_operand.vmem [shape: f32[2,1], index: 4, kind: output, shape index: {}]
  %s5 = sld [smem:[#allocation0]]
  $region34: #{bilstm_sentiment_forward.1} parent=0
    _
  %s7 = ssub.s32 1, %s5
  %s8 = scalar_select 0, %s7, %s5
  %v9 = vstv %s3
  %10 = vst [vmem:[#allocation4] sm:$0x1] %v9
  // Predicated region
  $region2: #{bilstm_sentiment_forward.1} parent=0 // pred_check
    _
  $region3: #{bilstm_sentiment_forward.1} parent=0 // pred_check_branch
    %12 = sbr.rel (0) target = $region5
  $region4: #{bilstm_sentiment_forward.1} parent=0 // pred_region
    _
  $region5: #{bilstm_sentiment_forward.1} parent=0 // pred_fallthru
    _
  // Predicated region
  $region6: #{bilstm_sentiment_forward.1} parent=0 // pred_check
    _
  $region7: #{bilstm_sentiment_forward.1} parent=0 // pred_check_branch
    %14 = sbr.rel (0) target = $region9
  $region8: #{bilstm_sentiment_forward.1} parent=0 // pred_region
    _
  $region9: #{bilstm_sentiment_forward.1} parent=0 // pred_fallthru
    _
  // Predicated region
  $region10: #{bilstm_sentiment_forward.1} parent=0 // pred_check
    _
  $region11: #{bilstm_sentiment_forward.1} parent=0 // pred_check_branch
    %16 = sbr.rel (0) target = $region13
  $region12: #{bilstm_sentiment_forward.1} parent=0 // pred_region
    _
  $region13: #{bilstm_sentiment_forward.1} parent=0 // pred_fallthru
    _
  // Predicated region
  $region14: #{bilstm_sentiment_forward.1} parent=0 // pred_check
    _
  $region15: #{bilstm_sentiment_forward.1} parent=0 // pred_check_branch
    %18 = sbr.rel (0) target = $region17
  $region16: #{bilstm_sentiment_forward.1} parent=0 // pred_region
    _
  $region17: #{bilstm_sentiment_forward.1} parent=0 // pred_fallthru
    _
  %p19 = scmp.eq.s32.totalorder 0, 0
  // Predicated region
  $region18: #{bilstm_sentiment_forward.1} parent=0 // pred_check
    %p20 = pneg %p19
  $region19: #{bilstm_sentiment_forward.1} parent=0 // pred_check_branch
    %22 = sbr.rel (%p20) target = $region21
  $region20: #{bilstm_sentiment_forward.1} parent=0 // pred_region
    %vm23 = vcmask 519168
    %24 = vst.msk [vmem:[#allocation2] sm:$0xf] %vm23, 0.0
    %vm25 = vcmask 257024
    %26 = vst.msk [vmem:[#allocation3] sm:$0xf] %vm25, 0.0
  $region21: #{bilstm_sentiment_forward.1} parent=0 // pred_fallthru
    _
  %v27 = vld [vmem:[%s1] sm:$0xff]
  %v28 = vld [vmem:[%s1 + $0x8] sm:$0xff]
  %v29 = vld [vmem:[%s1 + $0x10] sm:$0xff]
  %v30 = vld [vmem:[%s1 + $0x18] sm:$0xff]
  %v31 = vld [vmem:[%s1 + $0x20] sm:$0xff]
  %v32 = vld [vmem:[%s1 + $0x28] sm:$0xff]
  %v33 = vld [vmem:[%s1 + $0x30] sm:$0xff]
  %v34 = vld [vmem:[%s1 + $0x38] sm:$0xff]
  %v35 = vlaneseq
  %v36 = vand.u32 %v35, 127
  %vm37 = vcmp.ge.s32.totalorder %v36, 64
  %vm38 = vcmp.lt.s32.totalorder %v36, 96
  %vm39 = vmand %vm37, %vm38
  %v40 = vsel %vm39, 1.0, 0.5
  %v41 = vsel %vm39, 0.0, 0.5
  %v42 = vlaneseq
  %v43 = vshrl.u32 %v42, 7
  %vm44 = vcmp.lt.s32.totalorder %v43, 2
  %vm45 = vcmp.lt.s32.totalorder %v36, 32
  %vm46 = vmxor %vm44, %vm45
  %vm47 = vmxor %vm46, 1
  %v48 = vld [vmem:[#allocation2] sm:$0xf]
  %v49 = vld [vmem:[#allocation3] sm:$0xf]
  %v50 = vld [vmem:[%s0] sm:$0xf]
  %vm51 = vcmask 523264
  %v53 = vsel %vm51, %v48, 0
  %55 = vmatpush.msra.mxu0 0.0
  %56 = vmatpush.msra.mxu0 0.0
  %57 = vmatpush.msra.mxu0 0.0
  %58 = vmatpush.msra.mxu0 0.0
  %59 = vmatpush.msra.mxu0 0.0
  %60 = vmatpush.msra.mxu0 0.0
  %61 = vmatpush.msra.mxu0 0.0
  %62 = vmatpush.msra.mxu0 0.0
  %63 = vmatpush.msra.mxu0 %v34
  %64 = vmatpush.msra.mxu0 %v33
  %65 = vmatpush.msra.mxu0 %v32
  %66 = vmatpush.msra.mxu0 %v31
  %67 = vmatpush.msra.mxu0 %v30
  %68 = vmatpush.msra.mxu0 %v29
  %69 = vmatpush.msra.mxu0 %v28
  %70 = vmatpush.msra.mxu0 %v27
  %71 = vmatmul.f32.gmra.mxu0 %v53
  %v72 = vpop.f32.mrf.mxu0
  %v73 = vadd.f32 0.0, %v72
  %74 = vdwg.mxu0
  %v75 = vadd.f32 %v50, %v73
  %v76 = vmul.f32 %v75, %v40
  %v77 = vtanh.pop %v76
  %v78 = vmul.f32 %v40, %v77
  %v79 = vadd.f32 %v78, %v41
  %81 = vrot.lane.b32.xlu0 %v49, 32
  %v82 = vpop.permute.xlu0 %81
  %v84 = vmul.f32 %v79, %v82
  %86 = vrot.lane.b32.xlu0 %v79, 64
  %v87 = vpop.permute.xlu0 %86
  %v89 = vmul.f32 %v79, %v87
  %91 = vrot.lane.b32.xlu0 %v89, 32
  %v92 = vpop.permute.xlu0 %91
  %v94 = vadd.f32 %v84, %v92
  %v95 = vtanh.pop %v94
  %97 = vrot.lane.b32.xlu0 %v95, 64
  %v98 = vpop.permute.xlu0 %97
  %v100 = vmul.f32 %v79, %v98
  %102 = vrot.lane.b32.xlu0 %v100, 32
  %v103 = vpop.permute.xlu0 %102
  %105 = vrot.lane.b32.xlu0 %v100, 64
  %v106 = vpop.permute.xlu0 %105
  %vm108 = vcmask 261120
  %v109 = vsel %vm108, %v103, %v106
  %v110 = vsel %vm47, %v109, 0.0
  %s111 = scalar_lea.vmem %s0, 4
  %v112 = vld [vmem:[%s111] sm:$0xf]
  %v114 = vsel %vm51, %v110, 0
  %116 = vmatpush.msra.mxu0 0.0
  %117 = vmatpush.msra.mxu0 0.0
  %118 = vmatpush.msra.mxu0 0.0
  %119 = vmatpush.msra.mxu0 0.0
  %120 = vmatpush.msra.mxu0 0.0
  %121 = vmatpush.msra.mxu0 0.0
  %122 = vmatpush.msra.mxu0 0.0
  %123 = vmatpush.msra.mxu0 0.0
  %124 = vmatpush.msra.mxu0 %v34
  %125 = vmatpush.msra.mxu0 %v33
  %126 = vmatpush.msra.mxu0 %v32
  %127 = vmatpush.msra.mxu0 %v31
  %128 = vmatpush.msra.mxu0 %v30
  %129 = vmatpush.msra.mxu0 %v29
  %130 = vmatpush.msra.mxu0 %v28
  %131 = vmatpush.msra.mxu0 %v27
  %132 = vmatmul.f32.gmra.mxu0 %v114
  %v133 = vpop.f32.mrf.mxu0
  %v134 = vadd.f32 0.0, %v133
  %135 = vdwg.mxu0
  %v136 = vadd.f32 %v112, %v134
  %v137 = vmul.f32 %v136, %v40
  %v138 = vtanh.pop %v137
  %v139 = vmul.f32 %v40, %v138
  %v140 = vadd.f32 %v139, %v41
  %v141 = vmul.f32 %v140, %v94
  %143 = vrot.lane.b32.xlu0 %v140, 64
  %v144 = vpop.permute.xlu0 %143
  %v146 = vmul.f32 %v140, %v144
  %148 = vrot.lane.b32.xlu0 %v146, 32
  %v149 = vpop.permute.xlu0 %148
  %v151 = vadd.f32 %v141, %v149
  %v152 = vtanh.pop %v151
  %154 = vrot.lane.b32.xlu0 %v152, 64
  %v155 = vpop.permute.xlu0 %154
  %v157 = vmul.f32 %v140, %v155
  %159 = vrot.lane.b32.xlu0 %v157, 32
  %v160 = vpop.permute.xlu0 %159
  %162 = vrot.lane.b32.xlu0 %v157, 64
  %v163 = vpop.permute.xlu0 %162
  %v165 = vsel %vm108, %v160, %v163
  %v166 = vsel %vm47, %v165, 0.0
  %s167 = scalar_lea.vmem %s0, 8
  %v168 = vld [vmem:[%s167] sm:$0xf]
  %v170 = vsel %vm51, %v166, 0
  %172 = vmatpush.msra.mxu0 0.0
  %173 = vmatpush.msra.mxu0 0.0
  %174 = vmatpush.msra.mxu0 0.0
  %175 = vmatpush.msra.mxu0 0.0
  %176 = vmatpush.msra.mxu0 0.0
  %177 = vmatpush.msra.mxu0 0.0
  %178 = vmatpush.msra.mxu0 0.0
  %179 = vmatpush.msra.mxu0 0.0
  %180 = vmatpush.msra.mxu0 %v34
  %181 = vmatpush.msra.mxu0 %v33
  %182 = vmatpush.msra.mxu0 %v32
  %183 = vmatpush.msra.mxu0 %v31
  %184 = vmatpush.msra.mxu0 %v30
  %185 = vmatpush.msra.mxu0 %v29
  %186 = vmatpush.msra.mxu0 %v28
  %187 = vmatpush.msra.mxu0 %v27
  %188 = vmatmul.f32.gmra.mxu0 %v170
  %v189 = vpop.f32.mrf.mxu0
  %v190 = vadd.f32 0.0, %v189
  %191 = vdwg.mxu0
  %v192 = vadd.f32 %v168, %v190
  %v193 = vmul.f32 %v192, %v40
  %v194 = vtanh.pop %v193
  %v195 = vmul.f32 %v40, %v194
  %v196 = vadd.f32 %v195, %v41
  %v197 = vmul.f32 %v196, %v151
  %199 = vrot.lane.b32.xlu0 %v196, 64
  %v200 = vpop.permute.xlu0 %199
  %v202 = vmul.f32 %v196, %v200
  %204 = vrot.lane.b32.xlu0 %v202, 32
  %v205 = vpop.permute.xlu0 %204
  %v207 = vadd.f32 %v197, %v205
  %v208 = vtanh.pop %v207
  %210 = vrot.lane.b32.xlu0 %v208, 64
  %v211 = vpop.permute.xlu0 %210
  %v213 = vmul.f32 %v196, %v211
  %215 = vrot.lane.b32.xlu0 %v213, 32
  %v216 = vpop.permute.xlu0 %215
  %218 = vrot.lane.b32.xlu0 %v213, 64
  %v219 = vpop.permute.xlu0 %218
  %v221 = vsel %vm108, %v216, %v219
  %v222 = vsel %vm47, %v221, 0.0
  %s223 = scalar_lea.vmem %s0, 12
  %v224 = vld [vmem:[%s223] sm:$0xf]
  %v226 = vsel %vm51, %v222, 0
  %228 = vmatpush.msra.mxu0 0.0
  %229 = vmatpush.msra.mxu0 0.0
  %230 = vmatpush.msra.mxu0 0.0
  %231 = vmatpush.msra.mxu0 0.0
  %232 = vmatpush.msra.mxu0 0.0
  %233 = vmatpush.msra.mxu0 0.0
  %234 = vmatpush.msra.mxu0 0.0
  %235 = vmatpush.msra.mxu0 0.0
  %236 = vmatpush.msra.mxu0 %v34
  %237 = vmatpush.msra.mxu0 %v33
  %238 = vmatpush.msra.mxu0 %v32
  %239 = vmatpush.msra.mxu0 %v31
  %240 = vmatpush.msra.mxu0 %v30
  %241 = vmatpush.msra.mxu0 %v29
  %242 = vmatpush.msra.mxu0 %v28
  %243 = vmatpush.msra.mxu0 %v27
  %244 = vmatmul.f32.gmra.mxu0 %v226
  %v245 = vpop.f32.mrf.mxu0
  %v246 = vadd.f32 0.0, %v245
  %247 = vdwg.mxu0
  %v248 = vadd.f32 %v224, %v246
  %v249 = vmul.f32 %v248, %v40
  %v250 = vtanh.pop %v249
  %v251 = vmul.f32 %v40, %v250
  %v252 = vadd.f32 %v251, %v41
  %v253 = vmul.f32 %v252, %v207
  %255 = vrot.lane.b32.xlu0 %v252, 64
  %v256 = vpop.permute.xlu0 %255
  %v258 = vmul.f32 %v252, %v256
  %260 = vrot.lane.b32.xlu0 %v258, 32
  %v261 = vpop.permute.xlu0 %260
  %v263 = vadd.f32 %v253, %v261
  %v264 = vtanh.pop %v263
  %266 = vrot.lane.b32.xlu0 %v264, 64
  %v267 = vpop.permute.xlu0 %266
  %v269 = vmul.f32 %v252, %v267
  %271 = vrot.lane.b32.xlu0 %v269, 32
  %v272 = vpop.permute.xlu0 %271
  %274 = vrot.lane.b32.xlu0 %v269, 64
  %v275 = vpop.permute.xlu0 %274
  %v277 = vsel %vm108, %v272, %v275
  %v278 = vsel %vm47, %v277, 0.0
  %s279 = scalar_lea.vmem %s0, 16
  %v280 = vld [vmem:[%s279] sm:$0xf]
  %v282 = vsel %vm51, %v278, 0
  %284 = vmatpush.msra.mxu0 0.0
  %285 = vmatpush.msra.mxu0 0.0
  %286 = vmatpush.msra.mxu0 0.0
  %287 = vmatpush.msra.mxu0 0.0
  %288 = vmatpush.msra.mxu0 0.0
  %289 = vmatpush.msra.mxu0 0.0
  %290 = vmatpush.msra.mxu0 0.0
  %291 = vmatpush.msra.mxu0 0.0
  %292 = vmatpush.msra.mxu0 %v34
  %293 = vmatpush.msra.mxu0 %v33
  %294 = vmatpush.msra.mxu0 %v32
  %295 = vmatpush.msra.mxu0 %v31
  %296 = vmatpush.msra.mxu0 %v30
  %297 = vmatpush.msra.mxu0 %v29
  %298 = vmatpush.msra.mxu0 %v28
  %299 = vmatpush.msra.mxu0 %v27
  %300 = vmatmul.f32.gmra.mxu0 %v282
  %v301 = vpop.f32.mrf.mxu0
  %v302 = vadd.f32 0.0, %v301
  %303 = vdwg.mxu0
  %v304 = vadd.f32 %v280, %v302
  %v305 = vmul.f32 %v304, %v40
  %v306 = vtanh.pop %v305
  %v307 = vmul.f32 %v40, %v306
  %v308 = vadd.f32 %v307, %v41
  %v309 = vmul.f32 %v308, %v263
  %311 = vrot.lane.b32.xlu0 %v308, 64
  %v312 = vpop.permute.xlu0 %311
  %v314 = vmul.f32 %v308, %v312
  %316 = vrot.lane.b32.xlu0 %v314, 32
  %v317 = vpop.permute.xlu0 %316
  %v319 = vadd.f32 %v309, %v317
  %v320 = vtanh.pop %v319
  %322 = vrot.lane.b32.xlu0 %v320, 64
  %v323 = vpop.permute.xlu0 %322
  %v325 = vmul.f32 %v308, %v323
  %327 = vrot.lane.b32.xlu0 %v325, 32
  %v328 = vpop.permute.xlu0 %327
  %330 = vrot.lane.b32.xlu0 %v325, 64
  %v331 = vpop.permute.xlu0 %330
  %v333 = vsel %vm108, %v328, %v331
  %v334 = vsel %vm47, %v333, 0.0
  %s335 = scalar_lea.vmem %s0, 20
  %v336 = vld [vmem:[%s335] sm:$0xf]
  %v338 = vsel %vm51, %v334, 0
  %340 = vmatpush.msra.mxu0 0.0
  %341 = vmatpush.msra.mxu0 0.0
  %342 = vmatpush.msra.mxu0 0.0
  %343 = vmatpush.msra.mxu0 0.0
  %344 = vmatpush.msra.mxu0 0.0
  %345 = vmatpush.msra.mxu0 0.0
  %346 = vmatpush.msra.mxu0 0.0
  %347 = vmatpush.msra.mxu0 0.0
  %348 = vmatpush.msra.mxu0 %v34
  %349 = vmatpush.msra.mxu0 %v33
  %350 = vmatpush.msra.mxu0 %v32
  %351 = vmatpush.msra.mxu0 %v31
  %352 = vmatpush.msra.mxu0 %v30
  %353 = vmatpush.msra.mxu0 %v29
  %354 = vmatpush.msra.mxu0 %v28
  %355 = vmatpush.msra.mxu0 %v27
  %356 = vmatmul.f32.gmra.mxu0 %v338
  %v357 = vpop.f32.mrf.mxu0
  %v358 = vadd.f32 0.0, %v357
  %359 = vdwg.mxu0
  %v360 = vadd.f32 %v336, %v358
  %v361 = vmul.f32 %v360, %v40
  %v362 = vtanh.pop %v361
  %v363 = vmul.f32 %v40, %v362
  %v364 = vadd.f32 %v363, %v41
  %v365 = vmul.f32 %v364, %v319
  %367 = vrot.lane.b32.xlu0 %v364, 64
  %v368 = vpop.permute.xlu0 %367
  %v370 = vmul.f32 %v364, %v368
  %372 = vrot.lane.b32.xlu0 %v370, 32
  %v373 = vpop.permute.xlu0 %372
  %v375 = vadd.f32 %v365, %v373
  %v376 = vtanh.pop %v375
  %378 = vrot.lane.b32.xlu0 %v376, 64
  %v379 = vpop.permute.xlu0 %378
  %v381 = vmul.f32 %v364, %v379
  %383 = vrot.lane.b32.xlu0 %v381, 32
  %v384 = vpop.permute.xlu0 %383
  %386 = vrot.lane.b32.xlu0 %v381, 64
  %v387 = vpop.permute.xlu0 %386
  %v389 = vsel %vm108, %v384, %v387
  %v390 = vsel %vm47, %v389, 0.0
  %s391 = scalar_lea.vmem %s0, 24
  %v392 = vld [vmem:[%s391] sm:$0xf]
  %v394 = vsel %vm51, %v390, 0
  %396 = vmatpush.msra.mxu0 0.0
  %397 = vmatpush.msra.mxu0 0.0
  %398 = vmatpush.msra.mxu0 0.0
  %399 = vmatpush.msra.mxu0 0.0
  %400 = vmatpush.msra.mxu0 0.0
  %401 = vmatpush.msra.mxu0 0.0
  %402 = vmatpush.msra.mxu0 0.0
  %403 = vmatpush.msra.mxu0 0.0
  %404 = vmatpush.msra.mxu0 %v34
  %405 = vmatpush.msra.mxu0 %v33
  %406 = vmatpush.msra.mxu0 %v32
  %407 = vmatpush.msra.mxu0 %v31
  %408 = vmatpush.msra.mxu0 %v30
  %409 = vmatpush.msra.mxu0 %v29
  %410 = vmatpush.msra.mxu0 %v28
  %411 = vmatpush.msra.mxu0 %v27
  %412 = vmatmul.f32.gmra.mxu0 %v394
  %v413 = vpop.f32.mrf.mxu0
  %v414 = vadd.f32 0.0, %v413
  %415 = vdwg.mxu0
  %v416 = vadd.f32 %v392, %v414
  %v417 = vmul.f32 %v416, %v40
  %v418 = vtanh.pop %v417
  %v419 = vmul.f32 %v40, %v418
  %v420 = vadd.f32 %v419, %v41
  %v421 = vmul.f32 %v420, %v375
  %423 = vrot.lane.b32.xlu0 %v420, 64
  %v424 = vpop.permute.xlu0 %423
  %v426 = vmul.f32 %v420, %v424
  %428 = vrot.lane.b32.xlu0 %v426, 32
  %v429 = vpop.permute.xlu0 %428
  %v431 = vadd.f32 %v421, %v429
  %v432 = vtanh.pop %v431
  %434 = vrot.lane.b32.xlu0 %v432, 64
  %v435 = vpop.permute.xlu0 %434
  %v437 = vmul.f32 %v420, %v435
  %439 = vrot.lane.b32.xlu0 %v437, 32
  %v440 = vpop.permute.xlu0 %439
  %442 = vrot.lane.b32.xlu0 %v437, 64
  %v443 = vpop.permute.xlu0 %442
  %v445 = vsel %vm108, %v440, %v443
  %v446 = vsel %vm47, %v445, 0.0
  %s447 = scalar_lea.vmem %s0, 28
  %v448 = vld [vmem:[%s447] sm:$0xf]
  %v450 = vsel %vm51, %v446, 0
  %452 = vmatpush.msra.mxu0 0.0
  %453 = vmatpush.msra.mxu0 0.0
  %454 = vmatpush.msra.mxu0 0.0
  %455 = vmatpush.msra.mxu0 0.0
  %456 = vmatpush.msra.mxu0 0.0
  %457 = vmatpush.msra.mxu0 0.0
  %458 = vmatpush.msra.mxu0 0.0
  %459 = vmatpush.msra.mxu0 0.0
  %460 = vmatpush.msra.mxu0 %v34
  %461 = vmatpush.msra.mxu0 %v33
  %462 = vmatpush.msra.mxu0 %v32
  %463 = vmatpush.msra.mxu0 %v31
  %464 = vmatpush.msra.mxu0 %v30
  %465 = vmatpush.msra.mxu0 %v29
  %466 = vmatpush.msra.mxu0 %v28
  %467 = vmatpush.msra.mxu0 %v27
  %468 = vmatmul.f32.gmra.mxu0 %v450
  %v469 = vpop.f32.mrf.mxu0
  %v470 = vadd.f32 0.0, %v469
  %471 = vdwg.mxu0
  %v472 = vadd.f32 %v448, %v470
  %v473 = vmul.f32 %v472, %v40
  %v474 = vtanh.pop %v473
  %v475 = vmul.f32 %v40, %v474
  %v476 = vadd.f32 %v475, %v41
  %v477 = vmul.f32 %v476, %v431
  %479 = vrot.lane.b32.xlu0 %v476, 64
  %v480 = vpop.permute.xlu0 %479
  %v482 = vmul.f32 %v476, %v480
  %484 = vrot.lane.b32.xlu0 %v482, 32
  %v485 = vpop.permute.xlu0 %484
  %v487 = vadd.f32 %v477, %v485
  %v488 = vtanh.pop %v487
  %490 = vrot.lane.b32.xlu0 %v488, 64
  %v491 = vpop.permute.xlu0 %490
  %v493 = vmul.f32 %v476, %v491
  %495 = vrot.lane.b32.xlu0 %v493, 32
  %v496 = vpop.permute.xlu0 %495
  %498 = vrot.lane.b32.xlu0 %v493, 64
  %v499 = vpop.permute.xlu0 %498
  %v501 = vsel %vm108, %v496, %v499
  %v502 = vsel %vm47, %v501, 0.0
  %vm503 = vcmask 519168
  %504 = vst.msk [vmem:[#allocation2] sm:$0xf] %vm503, %v502
  %506 = vrot.lane.b32.xlu0 %v487, 96
  %v507 = vpop.permute.xlu0 %506
  %vm509 = vcmask 257024
  %510 = vst.msk [vmem:[#allocation3] sm:$0xf] %vm509, %v507
  // Predicated region
  $region22: #{bilstm_sentiment_forward.1} parent=0 // pred_check
    %p511 = pneg %p19
  $region23: #{bilstm_sentiment_forward.1} parent=0 // pred_check_branch
    %513 = sbr.rel (%p511) target = $region25
  $region24: #{bilstm_sentiment_forward.1} parent=0 // pred_region
    %v515 = vrot.slane %v502, 2
    %v517 = vsel %vm108, %v502, %v515
    %v518 = vld [vmem:[%s2] sm:$0x1]
    %v520 = vperm.slane %v518, 0
    %v522 = vmul.f32 %v517, %v520
    %vm523 = vcmask 517120
    %v524 = vsel %vm523, %v522, 0.0
    %525 = vadd.xlane.f32.xlu0 %v524
    %v526 = vpop.xlane.xlu0 %525
    %v527 = vld [vmem:[#allocation4] sm:$0x1]
    %v529 = vperm.slane %v527, 0
    %v531 = vadd.f32 %v526, %v529
    %v532 = vxor.u32 %v531, 2147483648
    %v533 = vmul.f32 %v532, 1.442695
    %v534 = vpow.pop %v533
    %v535 = vadd.f32 %v534, 1.0
    %v536 = vrcp.pop %v535
    %v537 = vmul.f32 %v535, %v536
    %v538 = vsub.f32 1.0, %v537
    %v539 = vmul.f32 %v536, %v538
    %v540 = vadd.f32 %v536, %v539
    %vm541 = vweird.f32 %v535
    %vm542 = vweird.f32 %v536
    %vm543 = vmor %vm541, %vm542
    %v544 = vsel %vm543, %v536, %v540
    %v545 = vand.u32 2147483647, %v535
    %vm546 = vcmp.eq.f32.partialorder %v545, 8.507059e+37
    %v547 = vand.u32 %v535, 2147483648
    %v548 = vor.u32 1.1754944e-38, %v547
    %v549 = vsel %vm546, %v548, %v544
    %v550 = vmul.f32 1.0, %v549
    %vm551 = vcmask 1024
    %552 = vst.msk [vmem:[%s4] sm:$0x3] %vm551, %v550
  $region25: #{bilstm_sentiment_forward.1} parent=0 // pred_fallthru
    _
  // Predicated region
  $region26: #{bilstm_sentiment_forward.1} parent=0 // pred_check
    _
  $region27: #{bilstm_sentiment_forward.1} parent=0 // pred_check_branch
    %554 = sbr.rel (0) target = $region29
  $region28: #{bilstm_sentiment_forward.1} parent=0 // pred_region
    _
  $region29: #{bilstm_sentiment_forward.1} parent=0 // pred_fallthru
    _
  // Predicated region
  $region30: #{bilstm_sentiment_forward.1} parent=0 // pred_check
    _
  $region31: #{bilstm_sentiment_forward.1} parent=0 // pred_check_branch
    %556 = sbr.rel (0) target = $region33
  $region32: #{bilstm_sentiment_forward.1} parent=0 // pred_region
    _
  $region33: #{bilstm_sentiment_forward.1} parent=0 // pred_fallthru
    _

</llo_original>
